<compile_context>
chip_gen: v5e
topology: v5e:2x2
jax: 0.10.0
libtpu: 0.0.40
codegen_flags: <defaults>
</compile_context>

<pallas_src>
import functools

import jax
import jax.numpy as jnp
from jax import lax
from jax.experimental import pallas as pl
from jax.experimental.pallas import tpu as pltpu

BN_EPS = 1e-5


def _batch_tile(batch, preferred=128):
    """Largest batch tile <= `preferred` that divides `batch` and is a multiple
    of 8 (sublane granularity). Falls back to the full batch, which is always a
    legal block (block == full dim bypasses the (8,128) divisibility rule)."""
    if batch <= preferred:
        return batch
    t = (preferred // 8) * 8
    while t >= 8:
        if batch % t == 0:
            return t
        t -= 8
    return batch


# --------------------------- kernel 1: BN statistics ------------------------ #
# Tiny prolog over the flattened (B, T*D) layout: accumulate per-column sum and
# sum-of-squares into lane-dense (1, T*D) outputs across batch tiles. The
# per-channel fold over T (O(T*D) work) happens in the wrapper. No normalized
# activation tensor is ever written back to HBM.

def _bn_stats_kernel(x_ref, sum_ref, sqsum_ref):
    @pl.when(pl.program_id(0) == 0)
    def _init():
        sum_ref[...] = jnp.zeros_like(sum_ref)
        sqsum_ref[...] = jnp.zeros_like(sqsum_ref)

    x = x_ref[...]
    sum_ref[...] += jnp.sum(x, axis=0, keepdims=True)
    sqsum_ref[...] += jnp.sum(x * x, axis=0, keepdims=True)


# ----------------------- kernel 2: fused BN-affine + MLP -------------------- #

def _fused_mlp_kernel(x_ref, scale_ref, shift_ref,
                      w1_ref, b1_ref, w2_ref, b2_ref, w3_ref, b3_ref, o_ref):
    # BatchNorm affine applied inline on the already-resident x tile
    # (rides the first MXU pass for free; no separate elementwise kernel).
    x = x_ref[...] * scale_ref[...] + shift_ref[...]

    # bf16 operands, f32 MXU accumulation. Biases are lane-aligned (1, N) blocks
    # added once per tile (no K grid axis -> no re-broadcast per step).
    h = jnp.dot(x.astype(w1_ref.dtype), w1_ref[...],
                preferred_element_type=jnp.float32) + b1_ref[...]
    h = jnp.maximum(h, 0.0)
    h = jnp.dot(h.astype(w2_ref.dtype), w2_ref[...],
                preferred_element_type=jnp.float32) + b2_ref[...]
    h = jnp.maximum(h, 0.0)
    o_ref[...] = (jnp.dot(h.astype(w3_ref.dtype), w3_ref[...],
                          preferred_element_type=jnp.float32)
                  + b3_ref[...]).astype(o_ref.dtype)


# ------------------------------- JAX wrapper -------------------------------- #

def feedforward_prediction(x, params, timesteps, latent_dims, *, batch_tile=128):
    B, T, D = x.shape
    assert T == timesteps
    in_dim = T * D

    # Row-major flatten: flat[:, t*D + d] == x[:, t, d] (free layout change).
    x_flat = x.reshape(B, in_dim)
    tile_b = _batch_tile(B, batch_tile)
    n_tiles = B // tile_b

    # ---- BN batch statistics (tiny prolog) ---- #
    stats_vmem = 4 * (tile_b * in_dim + 2 * in_dim) * 4 + (1 << 20)
    col_sum, col_sq = pl.pallas_call(
        _bn_stats_kernel,
        out_shape=(jax.ShapeDtypeStruct((1, in_dim), jnp.float32),
                   jax.ShapeDtypeStruct((1, in_dim), jnp.float32)),
        grid_spec=pltpu.PrefetchScalarGridSpec(
            num_scalar_prefetch=0,
            grid=(n_tiles,),
            in_specs=[pl.BlockSpec((tile_b, in_dim), lambda i: (i, 0))],
            out_specs=(pl.BlockSpec((1, in_dim), lambda i: (0, 0)),
                       pl.BlockSpec((1, in_dim), lambda i: (0, 0)))),
        compiler_params=pltpu.CompilerParams(
            dimension_semantics=("arbitrary",),      # accumulating outputs
            vmem_limit_bytes=min(48 << 20, max(16 << 20, stats_vmem))),
    )(x_flat)

    # Finish per-channel stats (O(T*D) scalar-ish work, negligible).
    n = float(B * T)
    mean = col_sum.reshape(T, D).sum(axis=0) / n
    var = col_sq.reshape(T, D).sum(axis=0) / n - mean * mean  # biased (PyTorch BN)
    # TODO(synk): for very large B*T switch to a two-pass / Welford reduction;
    # single-pass E[x^2]-mean^2 in f32 can lose precision when |mean| >> std.
    inv_std = lax.rsqrt(var + BN_EPS)
    scale_c = params["gamma"] * inv_std                   # (D,)
    shift_c = params["beta"] - mean * scale_c             # (D,)
    scale_flat = jnp.tile(scale_c, T).reshape(1, in_dim)  # per flattened column
    shift_flat = jnp.tile(shift_c, T).reshape(1, in_dim)

    # bf16 weights (MXU rate + half the DMA/VMEM), f32 biases.
    w1 = params["w1"].astype(jnp.bfloat16); b1 = params["b1"].reshape(1, -1)
    w2 = params["w2"].astype(jnp.bfloat16); b2 = params["b2"].reshape(1, -1)
    w3 = params["w3"].astype(jnp.bfloat16); b3 = params["b3"].reshape(1, -1)
    h1, h2, out_dim = w1.shape[1], w2.shape[1], w3.shape[1]

    # Explicit VMEM budget: double-buffered x/out tiles + resident bf16 weights
    # + intermediates; capped at 48 MiB (safe on v7x's 64 MiB physical VMEM).
    mlp_vmem = (2 * (tile_b * in_dim * 4 + 2 * in_dim * 4
                     + (in_dim * h1 + h1 * h2 + h2 * out_dim) * 2
                     + (h1 + h2 + out_dim) * 4
                     + tile_b * out_dim * 4)
                + tile_b * (in_dim + h1 + h2 + out_dim) * 4)
    # TODO(synk): if resident weights ever blow this budget (huge layers), add a
    # K-axis grid with a VMEM accumulator (pl.when init/finalize) instead.

    const = lambda i: (0, 0)
    out_flat = pl.pallas_call(
        _fused_mlp_kernel,
        out_shape=jax.ShapeDtypeStruct((B, out_dim), jnp.float32),
        grid_spec=pltpu.PrefetchScalarGridSpec(
            num_scalar_prefetch=0,
            grid=(n_tiles,),
            in_specs=[pl.BlockSpec((tile_b, in_dim), lambda i: (i, 0)),  # x tile
                      pl.BlockSpec((1, in_dim), const),                 # BN scale
                      pl.BlockSpec((1, in_dim), const),                 # BN shift
                      pl.BlockSpec((in_dim, h1), const),                # resident weights
                      pl.BlockSpec((1, h1), const),
                      pl.BlockSpec((h1, h2), const),
                      pl.BlockSpec((1, h2), const),
                      pl.BlockSpec((h2, out_dim), const),
                      pl.BlockSpec((1, out_dim), const)],
            out_specs=pl.BlockSpec((tile_b, out_dim), lambda i: (i, 0))),
        compiler_params=pltpu.CompilerParams(
            dimension_semantics=("parallel",),   # shard batch tiles across TCs (v7x)
            vmem_limit_bytes=min(48 << 20, max(16 << 20, 2 * mlp_vmem))),
    )(x_flat, scale_flat, shift_flat, w1, b1, w2, b2, w3, b3)

    return out_flat.reshape(B, timesteps, latent_dims)


# --------------------------- deterministic parameters ----------------------- #

def init_params(key, observed_dims, latent_dims, timesteps, hidden_sizes):
    in_dim = observed_dims * timesteps
    out_dim = latent_dims * timesteps
    sizes = [in_dim] + list(hidden_sizes) + [out_dim]
    kg, kb, *wkeys = jax.random.split(key, 2 + len(sizes) - 1)
    params = {
        # learnable BN affine (non-trivial values to exercise the code path)
        "gamma": 1.0 + 0.1 * jax.random.normal(kg, (observed_dims,), jnp.float32),
        "beta": 0.1 * jax.random.normal(kb, (observed_dims,), jnp.float32),
    }
    for i in range(len(sizes) - 1):
        wk, bk = jax.random.split(wkeys[i])
        bound = 1.0 / (sizes[i] ** 0.5)
        # weights stored already transposed: (in, out), so kernels do x @ W
        params[f"w{i + 1}"] = jax.random.uniform(
            wk, (sizes[i], sizes[i + 1]), jnp.float32, minval=-bound, maxval=bound)
        params[f"b{i + 1}"] = jax.random.uniform(
            bk, (sizes[i + 1],), jnp.float32, minval=-bound, maxval=bound)
    return params


# ----------------------------- pure-JAX reference --------------------------- #
# Mirrors the kernel's deliberate bf16-operand / f32-accumulate matmuls so the
# comparison isolates kernel-structure errors rather than quantization choice.

def reference(x, params, timesteps, latent_dims):
    B, T, D = x.shape
    mean = jnp.mean(x, axis=(0, 1), keepdims=True)
    var = jnp.mean(jnp.square(x - mean), axis=(0, 1), keepdims=True)
    xn = (x - mean) / jnp.sqrt(var + BN_EPS) * params["gamma"] + params["beta"]
    h = xn.reshape(B, T * D)

    def mm(a, w):
        return jnp.dot(a.astype(jnp.bfloat16), w.astype(jnp.bfloat16),
                       preferred_element_type=jnp.float32)

    h = jnp.maximum(mm(h, params["w1"]) + params["b1"], 0.0)
    h = jnp.maximum(mm(h, params["w2"]) + params["b2"], 0.0)
    out = mm(h, params["w3"]) + params["b3"]
    return out.reshape(B, timesteps, latent_dims)


if __name__ == "__main__":
    # Small but kernel-friendly demo shapes: hidden and T*latent are multiples
    # of 128 (lane-dense MXU N-dims and unmasked output stores); batch tiles of
    # 128 give a 2-step "parallel" grid.
    batch, timesteps, observed_dims, latent_dims = 256, 8, 4, 16
    hidden_sizes = [128, 128]   # layers_list = [(128, nn.ReLU()), (128, nn.ReLU())]

    key = jax.random.PRNGKey(0)
    kx, kp = jax.random.split(key)
    x = jax.random.normal(kx, (batch, timesteps, observed_dims), jnp.float32)
    params = init_params(kp, observed_dims, latent_dims, timesteps, hidden_sizes)

    fwd = jax.jit(functools.partial(feedforward_prediction,
                                    timesteps=timesteps, latent_dims=latent_dims))
    out = jax.block_until_ready(fwd(x, params))

    ref = reference(x, params, timesteps, latent_dims)
    assert out.shape == (batch, timesteps, latent_dims)
    max_diff = float(jnp.max(jnp.abs(out - ref)))
    assert jnp.allclose(out, ref, atol=2e-2, rtol=2e-2), \
        f"mismatch vs reference (max abs diff {max_diff})"
    print("KERNEL_OK")
</pallas_src>

<mosaic_0001>
module attributes {stable_mosaic.version = 11 : i64} {
  func.func @_bn_stats_kernel(%arg0: i32, %arg1: memref<128x32xf32, #tpu.memory_space<vmem>>, %arg2: memref<1x32xf32, #tpu.memory_space<vmem>>, %arg3: memref<1x32xf32, #tpu.memory_space<vmem>>) attributes {dimension_semantics = [#tpu.dimension_semantics<arbitrary>], iteration_bounds = array<i64: 2>, scalar_prefetch = 0 : i64, scratch_operands = 0 : i64, tpu.core_type = #tpu.core_type<tc>, window_params = [{transform_indices = @transform_0, window_bounds = array<i64: 128, 32>}, {pipeline_mode = #tpu.pipeline_mode<synchronous>, transform_indices = @transform_1, window_bounds = array<i64: 1, 32>}, {pipeline_mode = #tpu.pipeline_mode<synchronous>, transform_indices = @transform_2, window_bounds = array<i64: 1, 32>}]} {
    %c0_i32 = arith.constant 0 : i32
    %0 = arith.cmpi eq, %arg0, %c0_i32 : i32
    %1 = arith.extui %0 : i1 to i32
    %c0_i32_0 = arith.constant 0 : i32
    %2 = arith.cmpi ne, %1, %c0_i32_0 : i32
    scf.if %2 {
      %cst_11 = arith.constant 0.000000e+00 : f32
      %15 = vector.broadcast %cst_11 : f32 to vector<1x32xf32>
      %c0_12 = arith.constant 0 : index
      %c0_13 = arith.constant 0 : index
      %16 = vector.load %arg2[%c0_12, %c0_13] : memref<1x32xf32, #tpu.memory_space<vmem>>, vector<1x32xf32>
      tpu.vector_store %arg2[%c0_12, %c0_13], %15 {strides = array<i32>} : memref<1x32xf32, #tpu.memory_space<vmem>>, vector<1x32xf32>,
      %cst_14 = arith.constant 0.000000e+00 : f32
      %17 = vector.broadcast %cst_14 : f32 to vector<1x32xf32>
      %c0_15 = arith.constant 0 : index
      %c0_16 = arith.constant 0 : index
      %18 = vector.load %arg3[%c0_15, %c0_16] : memref<1x32xf32, #tpu.memory_space<vmem>>, vector<1x32xf32>
      tpu.vector_store %arg3[%c0_15, %c0_16], %17 {strides = array<i32>} : memref<1x32xf32, #tpu.memory_space<vmem>>, vector<1x32xf32>,
    } else {
    }
    %c0 = arith.constant 0 : index
    %c0_1 = arith.constant 0 : index
    %3 = vector.load %arg1[%c0, %c0_1] : memref<128x32xf32, #tpu.memory_space<vmem>>, vector<128x32xf32>
    %c0_2 = arith.constant 0 : index
    %c0_3 = arith.constant 0 : index
    %4 = vector.load %arg2[%c0_2, %c0_3] : memref<1x32xf32, #tpu.memory_space<vmem>>, vector<1x32xf32>
    %cst = arith.constant dense<0.000000e+00> : vector<32xf32>
    %5 = vector.multi_reduction <add>, %3, %cst [0] : vector<128x32xf32> to vector<32xf32>
    %6 = vector.shape_cast %5 : vector<32xf32> to vector<1x32xf32>
    %7 = arith.addf %4, %6 : vector<1x32xf32>
    %c0_4 = arith.constant 0 : index
    %c0_5 = arith.constant 0 : index
    %8 = vector.load %arg2[%c0_4, %c0_5] : memref<1x32xf32, #tpu.memory_space<vmem>>, vector<1x32xf32>
    tpu.vector_store %arg2[%c0_4, %c0_5], %7 {strides = array<i32>} : memref<1x32xf32, #tpu.memory_space<vmem>>, vector<1x32xf32>,
    %c0_6 = arith.constant 0 : index
    %c0_7 = arith.constant 0 : index
    %9 = vector.load %arg3[%c0_6, %c0_7] : memref<1x32xf32, #tpu.memory_space<vmem>>, vector<1x32xf32>
    %10 = arith.mulf %3, %3 : vector<128x32xf32>
    %cst_8 = arith.constant dense<0.000000e+00> : vector<32xf32>
    %11 = vector.multi_reduction <add>, %10, %cst_8 [0] : vector<128x32xf32> to vector<32xf32>
    %12 = vector.shape_cast %11 : vector<32xf32> to vector<1x32xf32>
    %13 = arith.addf %9, %12 : vector<1x32xf32>
    %c0_9 = arith.constant 0 : index
    %c0_10 = arith.constant 0 : index
    %14 = vector.load %arg3[%c0_9, %c0_10] : memref<1x32xf32, #tpu.memory_space<vmem>>, vector<1x32xf32>
    tpu.vector_store %arg3[%c0_9, %c0_10], %13 {strides = array<i32>} : memref<1x32xf32, #tpu.memory_space<vmem>>, vector<1x32xf32>,
    return
  }
  func.func @transform_0(%arg0: i32) -> (i32, i32) {
    %c0_i32 = arith.constant 0 : i32
    %c0_i32_0 = arith.constant 0 : i32
    return %arg0, %c0_i32 : i32, i32
  }
  func.func @transform_1(%arg0: i32) -> (i32, i32) {
    %c0_i32 = arith.constant 0 : i32
    %c0_i32_0 = arith.constant 0 : i32
    %c0_i32_1 = arith.constant 0 : i32
    return %c0_i32, %c0_i32_0 : i32, i32
  }
  func.func @transform_2(%arg0: i32) -> (i32, i32) {
    %c0_i32 = arith.constant 0 : i32
    %c0_i32_0 = arith.constant 0 : i32
    %c0_i32_1 = arith.constant 0 : i32
    return %c0_i32, %c0_i32_0 : i32, i32
  }
}

module attributes {stable_mosaic.version = 11 : i64} {
  func.func @_fused_mlp_kernel(%arg0: i32, %arg1: memref<128x32xf32, #tpu.memory_space<vmem>>, %arg2: memref<1x32xf32, #tpu.memory_space<vmem>>, %arg3: memref<1x32xf32, #tpu.memory_space<vmem>>, %arg4: memref<32x128xbf16, #tpu.memory_space<vmem>>, %arg5: memref<1x128xf32, #tpu.memory_space<vmem>>, %arg6: memref<128x128xbf16, #tpu.memory_space<vmem>>, %arg7: memref<1x128xf32, #tpu.memory_space<vmem>>, %arg8: memref<128x128xbf16, #tpu.memory_space<vmem>>, %arg9: memref<1x128xf32, #tpu.memory_space<vmem>>, %arg10: memref<128x128xf32, #tpu.memory_space<vmem>>) attributes {dimension_semantics = [#tpu.dimension_semantics<parallel>], iteration_bounds = array<i64: 2>, scalar_prefetch = 0 : i64, scratch_operands = 0 : i64, tpu.core_type = #tpu.core_type<tc>, window_params = [{transform_indices = @transform_0, window_bounds = array<i64: 128, 32>}, {pipeline_mode = #tpu.pipeline_mode<synchronous>, transform_indices = @transform_1, window_bounds = array<i64: 1, 32>}, {pipeline_mode = #tpu.pipeline_mode<synchronous>, transform_indices = @transform_2, window_bounds = array<i64: 1, 32>}, {pipeline_mode = #tpu.pipeline_mode<synchronous>, transform_indices = @transform_3, window_bounds = array<i64: 32, 128>}, {pipeline_mode = #tpu.pipeline_mode<synchronous>, transform_indices = @transform_4, window_bounds = array<i64: 1, 128>}, {pipeline_mode = #tpu.pipeline_mode<synchronous>, transform_indices = @transform_5, window_bounds = array<i64: 128, 128>}, {pipeline_mode = #tpu.pipeline_mode<synchronous>, transform_indices = @transform_6, window_bounds = array<i64: 1, 128>}, {pipeline_mode = #tpu.pipeline_mode<synchronous>, transform_indices = @transform_7, window_bounds = array<i64: 128, 128>}, {pipeline_mode = #tpu.pipeline_mode<synchronous>, transform_indices = @transform_8, window_bounds = array<i64: 1, 128>}, {transform_indices = @transform_9, window_bounds = array<i64: 128, 128>}]} {
    %c0 = arith.constant 0 : index
    %c0_0 = arith.constant 0 : index
    %0 = vector.load %arg1[%c0, %c0_0] : memref<128x32xf32, #tpu.memory_space<vmem>>, vector<128x32xf32>
    %c0_1 = arith.constant 0 : index
    %c0_2 = arith.constant 0 : index
    %1 = vector.load %arg2[%c0_1, %c0_2] : memref<1x32xf32, #tpu.memory_space<vmem>>, vector<1x32xf32>
    %2 = vector.broadcast %1 : vector<1x32xf32> to vector<128x32xf32>
    %3 = arith.mulf %0, %2 : vector<128x32xf32>
    %c0_3 = arith.constant 0 : index
    %c0_4 = arith.constant 0 : index
    %4 = vector.load %arg3[%c0_3, %c0_4] : memref<1x32xf32, #tpu.memory_space<vmem>>, vector<1x32xf32>
    %5 = vector.broadcast %4 : vector<1x32xf32> to vector<128x32xf32>
    %6 = arith.addf %3, %5 : vector<128x32xf32>
    %7 = arith.truncf %6 : vector<128x32xf32> to vector<128x32xbf16>
    %c0_5 = arith.constant 0 : index
    %c0_6 = arith.constant 0 : index
    %8 = vector.load %arg4[%c0_5, %c0_6] : memref<32x128xbf16, #tpu.memory_space<vmem>>, vector<32x128xbf16>
    %cst = arith.constant dense<0.000000e+00> : vector<128x128xf32>
    %9 = tpu.matmul %7, %8, %cst {dimension_numbers = #tpu.dot_dimension_numbers<[1], [0], [0], [1], [0, 0, 1, 1], [], []>} : vector<128x32xbf16>, vector<32x128xbf16>, vector<128x128xf32> -> vector<128x128xf32>
    %c0_7 = arith.constant 0 : index
    %c0_8 = arith.constant 0 : index
    %10 = vector.load %arg5[%c0_7, %c0_8] : memref<1x128xf32, #tpu.memory_space<vmem>>, vector<1x128xf32>
    %11 = vector.broadcast %10 : vector<1x128xf32> to vector<128x128xf32>
    %12 = arith.addf %9, %11 : vector<128x128xf32>
    %cst_9 = arith.constant 0.000000e+00 : f32
    %13 = vector.broadcast %cst_9 : f32 to vector<128x128xf32>
    %14 = arith.maximumf %12, %13 : vector<128x128xf32>
    %15 = arith.truncf %14 : vector<128x128xf32> to vector<128x128xbf16>
    %c0_10 = arith.constant 0 : index
    %c0_11 = arith.constant 0 : index
    %16 = vector.load %arg6[%c0_10, %c0_11] : memref<128x128xbf16, #tpu.memory_space<vmem>>, vector<128x128xbf16>
    %cst_12 = arith.constant dense<0.000000e+00> : vector<128x128xf32>
    %17 = tpu.matmul %15, %16, %cst_12 {dimension_numbers = #tpu.dot_dimension_numbers<[1], [0], [0], [1], [0, 0, 1, 1], [], []>} : vector<128x128xbf16>, vector<128x128xbf16>, vector<128x128xf32> -> vector<128x128xf32>
    %c0_13 = arith.constant 0 : index
    %c0_14 = arith.constant 0 : index
    %18 = vector.load %arg7[%c0_13, %c0_14] : memref<1x128xf32, #tpu.memory_space<vmem>>, vector<1x128xf32>
    %19 = vector.broadcast %18 : vector<1x128xf32> to vector<128x128xf32>
    %20 = arith.addf %17, %19 : vector<128x128xf32>
    %cst_15 = arith.constant 0.000000e+00 : f32
    %21 = vector.broadcast %cst_15 : f32 to vector<128x128xf32>
    %22 = arith.maximumf %20, %21 : vector<128x128xf32>
    %23 = arith.truncf %22 : vector<128x128xf32> to vector<128x128xbf16>
    %c0_16 = arith.constant 0 : index
    %c0_17 = arith.constant 0 : index
    %24 = vector.load %arg8[%c0_16, %c0_17] : memref<128x128xbf16, #tpu.memory_space<vmem>>, vector<128x128xbf16>
    %cst_18 = arith.constant dense<0.000000e+00> : vector<128x128xf32>
    %25 = tpu.matmul %23, %24, %cst_18 {dimension_numbers = #tpu.dot_dimension_numbers<[1], [0], [0], [1], [0, 0, 1, 1], [], []>} : vector<128x128xbf16>, vector<128x128xbf16>, vector<128x128xf32> -> vector<128x128xf32>
    %c0_19 = arith.constant 0 : index
    %c0_20 = arith.constant 0 : index
    %26 = vector.load %arg9[%c0_19, %c0_20] : memref<1x128xf32, #tpu.memory_space<vmem>>, vector<1x128xf32>
    %27 = vector.broadcast %26 : vector<1x128xf32> to vector<128x128xf32>
    %28 = arith.addf %25, %27 : vector<128x128xf32>
    %c0_21 = arith.constant 0 : index
    %c0_22 = arith.constant 0 : index
    %29 = vector.load %arg10[%c0_21, %c0_22] : memref<128x128xf32, #tpu.memory_space<vmem>>, vector<128x128xf32>
    tpu.vector_store %arg10[%c0_21, %c0_22], %28 {strides = array<i32>} : memref<128x128xf32, #tpu.memory_space<vmem>>, vector<128x128xf32>,
    return
  }
  func.func @transform_0(%arg0: i32) -> (i32, i32) {
    %c0_i32 = arith.constant 0 : i32
    %c0_i32_0 = arith.constant 0 : i32
    return %arg0, %c0_i32 : i32, i32
  }
  func.func @transform_1(%arg0: i32) -> (i32, i32) {
    %c0_i32 = arith.constant 0 : i32
    %c0_i32_0 = arith.constant 0 : i32
    %c0_i32_1 = arith.constant 0 : i32
    return %c0_i32, %c0_i32_0 : i32, i32
  }
  func.func @transform_2(%arg0: i32) -> (i32, i32) {
    %c0_i32 = arith.constant 0 : i32
    %c0_i32_0 = arith.constant 0 : i32
    %c0_i32_1 = arith.constant 0 : i32
    return %c0_i32, %c0_i32_0 : i32, i32
  }
  func.func @transform_3(%arg0: i32) -> (i32, i32) {
    %c0_i32 = arith.constant 0 : i32
    %c0_i32_0 = arith.constant 0 : i32
    %c0_i32_1 = arith.constant 0 : i32
    return %c0_i32, %c0_i32_0 : i32, i32
  }
  func.func @transform_4(%arg0: i32) -> (i32, i32) {
    %c0_i32 = arith.constant 0 : i32
    %c0_i32_0 = arith.constant 0 : i32
    %c0_i32_1 = arith.constant 0 : i32
    return %c0_i32, %c0_i32_0 : i32, i32
  }
  func.func @transform_5(%arg0: i32) -> (i32, i32) {
    %c0_i32 = arith.constant 0 : i32
    %c0_i32_0 = arith.constant 0 : i32
    %c0_i32_1 = arith.constant 0 : i32
    return %c0_i32, %c0_i32_0 : i32, i32
  }
  func.func @transform_6(%arg0: i32) -> (i32, i32) {
    %c0_i32 = arith.constant 0 : i32
    %c0_i32_0 = arith.constant 0 : i32
    %c0_i32_1 = arith.constant 0 : i32
    return %c0_i32, %c0_i32_0 : i32, i32
  }
  func.func @transform_7(%arg0: i32) -> (i32, i32) {
    %c0_i32 = arith.constant 0 : i32
    %c0_i32_0 = arith.constant 0 : i32
    %c0_i32_1 = arith.constant 0 : i32
    return %c0_i32, %c0_i32_0 : i32, i32
  }
  func.func @transform_8(%arg0: i32) -> (i32, i32) {
    %c0_i32 = arith.constant 0 : i32
    %c0_i32_0 = arith.constant 0 : i32
    %c0_i32_1 = arith.constant 0 : i32
    return %c0_i32, %c0_i32_0 : i32, i32
  }
  func.func @transform_9(%arg0: i32) -> (i32, i32) {
    %c0_i32 = arith.constant 0 : i32
    %c0_i32_0 = arith.constant 0 : i32
    return %arg0, %c0_i32 : i32, i32
  }
}

</mosaic_0001>

<llo_original>
// kernel: tile.18
$region0: #{tile.18}
  #allocation0 [shape = 's32[1]{0}', space=sflag, size = 0x4, scoped, tag = 'scoped memory for tile.18']
  %s0 = inlined_call_operand.vmem [shape: f32[4], index: 0, kind: input, shape index: {}]
  %s1 = inlined_call_operand.vmem [shape: f32[8,4], index: 1, kind: output, shape index: {}]
  // Predicated region
  $region2: #{tile.18} parent=0 // pred_check
    _
  $region3: #{tile.18} parent=0 // pred_check_branch
    %3 = sbr.rel (0) target = $region5
  $region4: #{tile.18} parent=0 // pred_region
    _
  $region5: #{tile.18} parent=0 // pred_fallthru
    _
  %v4 = vld [vmem:[%s0] ss:$0 sm:$0xff]
  %5 = vst [vmem:[%s1] sm:$0xff] %v4

// kernel: tile.19
$region0: #{tile.19}
  %s0 = inlined_call_operand.vmem [shape: f32[8,4], index: 0, kind: input, shape index: {}]
  %s1 = inlined_call_operand.vmem [shape: f32[1,32], index: 1, kind: output, shape index: {}]
  $region1: #{tile.19} parent=0
    #allocation0 [shape = 'u8[4096]{0}', space=vmem, size = 0x1000, scoped, tag = 'scoped mem for output reshape']
    %v2 = vld [vmem:[%s0] sm:$0x1]
    %vm3 = vcmask 31744
    %4 = vst.msk [vmem:[#allocation0] sm:$0x1] %vm3, %v2
    %s5 = scalar_lea.vmem %s0, 7
    %v6 = vld [vmem:[%s5] sm:$0x1]
    %7 = vrot.lane.b32.xlu0 %v6, 28
    %v8 = vpop.permute.xlu0 %7
    %vm9 = vcmask 261344
    %10 = vst.msk [vmem:[#allocation0] sm:$0x1] %vm9, %v8
    %s11 = scalar_lea.vmem %s0, 6
    %v12 = vld [vmem:[%s11] sm:$0x1]
    %13 = vrot.lane.b32.xlu0 %v12, 24
    %v14 = vpop.permute.xlu0 %13
    %vm15 = vcmask 228544
    %16 = vst.msk [vmem:[#allocation0] sm:$0x1] %vm15, %v14
    %s17 = scalar_lea.vmem %s0, 5
    %v18 = vld [vmem:[%s17] sm:$0x1]
    %19 = vrot.lane.b32.xlu0 %v18, 20
    %v20 = vpop.permute.xlu0 %19
    %vm21 = vcmask 195744
    %22 = vst.msk [vmem:[#allocation0] sm:$0x1] %vm21, %v20
    %s23 = scalar_lea.vmem %s0, 4
    %v24 = vld [vmem:[%s23] sm:$0x1]
    %25 = vrot.lane.b32.xlu0 %v24, 16
    %v26 = vpop.permute.xlu0 %25
    %vm27 = vcmask 162944
    %28 = vst.msk [vmem:[#allocation0] sm:$0x1] %vm27, %v26
    %s29 = scalar_lea.vmem %s0, 3
    %v30 = vld [vmem:[%s29] sm:$0x1]
    %31 = vrot.lane.b32.xlu0 %v30, 12
    %v32 = vpop.permute.xlu0 %31
    %vm33 = vcmask 130144
    %34 = vst.msk [vmem:[#allocation0] sm:$0x1] %vm33, %v32
    %s35 = scalar_lea.vmem %s0, 2
    %v36 = vld [vmem:[%s35] sm:$0x1]
    %37 = vrot.lane.b32.xlu0 %v36, 8
    %v38 = vpop.permute.xlu0 %37
    %vm39 = vcmask 97344
    %40 = vst.msk [vmem:[#allocation0] sm:$0x1] %vm39, %v38
    %s41 = scalar_lea.vmem %s0, 1
    %v42 = vld [vmem:[%s41] sm:$0x1]
    %43 = vrot.lane.b32.xlu0 %v42, 4
    %v44 = vpop.permute.xlu0 %43
    %vm45 = vcmask 64544
    %46 = vst.msk [vmem:[#allocation0] sm:$0x1] %vm45, %v44
    %s48 = ssub.s32 2, 1
    %v49 = vld [vmem:[#allocation0] sm:%s48]
    %s51 = ssub.s32 2, 1
    %52 = vst [vmem:[%s1] sm:%s51] %v49

// kernel: feedforward_prediction.2
$region0: #{feedforward_prediction.2}
  #allocation0 [shape = 'u32[]', space=smem, size = 0x4, offset = 0x4, fixed_abs, tag = 'smem constant byte address 0x4 - core index']
  #allocation1 [shape = 'u32[72,128]{1,0:T(1,128)}', space=vmem, size = 0x9000, scoped, tag = 'internal scratch']
  %s0 = inlined_call_operand.vmem [shape: f32[256,32], index: 0, kind: input, shape index: {}]
  %s1 = inlined_call_operand.vmem [shape: f32[1,32], index: 1, kind: output, shape index: {0}]
  %s2 = inlined_call_operand.vmem [shape: f32[1,32], index: 2, kind: output, shape index: {1}]
  %3 = xla_tuple %s1, %s2
  %s4 = sld [smem:[#allocation0]]
  $region49: #{feedforward_prediction.2} parent=0
    _
  %s6 = ssub.s32 1, %s4
  %s7 = scalar_select 0, %s6, %s4
  loop: start=0, step=1, limit=4
  $region2: #{feedforward_prediction.2} parent=0 // loop_pre_header
    _
  $region3: #{feedforward_prediction.2} parent=0 // loop_header
    %s9 = sphi 0, %s13
    %p10 = scmp.ge.s32.totalorder %s9, 4
    %s19 = sphi 0, %s21
    %s22 = sphi 0, %s19
    %s23 = sphi 0, %s22
    %s39 = sphi 0, %s23
    %s43 = sphi 0, %s43
    %s45 = sphi 0, %s43
    %s46 = sphi 0, %s45
    %s60 = sphi 0, %s46
    %s64 = sphi 0, %s64
    %s66 = sphi 0, %s64
    %s67 = sphi 0, %s66
    %s81 = sphi 0, %s67
  $region4: #{feedforward_prediction.2} parent=0 // loop_header_branch
    %12 = sbr.rel (%p10) target = $region8
  $region5: #{feedforward_prediction.2} parent=0 // loop_body
    %s14 = ssub.s32 %s9, 1
    %s15 = ssub.s32 %s9, 2
    %s16 = sadd.s32 %s9, 1
    %s17 = ssub.s32 %s9, %s16
    %p18 = scmp.eq.s32.totalorder %s17, 0
    %s20 = sadd.s32 %s19, 1
    %s21 = scalar_select %p18, %s19, %s20
    %p24 = pneg %p18
    %p25 = scmp.eq.s32.totalorder %s9, 1
    %p26 = por %p24, %p25
    %p27 = scmp.ne.s32.totalorder %s19, %s22
    %p28 = scmp.eq.s32.totalorder %s9, 0
    %p29 = por %p27, %p28
    %p30 = scmp.ne.s32.totalorder %s19, %s22
    %p31 = scmp.eq.s32.totalorder %s14, 1
    %p32 = por %p30, %p31
    %p33 = scmp.ne.s32.totalorder %s22, %s23
    %p34 = scmp.eq.s32.totalorder %s14, 0
    %p35 = por %p33, %p34
    %p36 = scmp.ne.s32.totalorder %s22, %s23
    %p37 = scmp.eq.s32.totalorder %s15, 1
    %p38 = por %p36, %p37
    %p40 = scmp.ne.s32.totalorder %s23, %s39
    %p41 = scmp.eq.s32.totalorder %s15, 0
    %p42 = por %p40, %p41
    %s44 = sadd.s32 %s43, 1
    %p47 = scmp.eq.s32.totalorder %s9, 1
    %p48 = scmp.ne.s32.totalorder %s43, %s45
    %p49 = scmp.eq.s32.totalorder %s9, 0
    %p50 = por %p48, %p49
    %p51 = scmp.ne.s32.totalorder %s43, %s45
    %p52 = scmp.eq.s32.totalorder %s14, 1
    %p53 = por %p51, %p52
    %p54 = scmp.ne.s32.totalorder %s45, %s46
    %p55 = scmp.eq.s32.totalorder %s14, 0
    %p56 = por %p54, %p55
    %p57 = scmp.ne.s32.totalorder %s45, %s46
    %p58 = scmp.eq.s32.totalorder %s15, 1
    %p59 = por %p57, %p58
    %p61 = scmp.ne.s32.totalorder %s46, %s60
    %p62 = scmp.eq.s32.totalorder %s15, 0
    %p63 = por %p61, %p62
    %s65 = sadd.s32 %s64, 1
    %p68 = scmp.eq.s32.totalorder %s9, 1
    %p69 = scmp.ne.s32.totalorder %s64, %s66
    %p70 = scmp.eq.s32.totalorder %s9, 0
    %p71 = por %p69, %p70
    %p72 = scmp.ne.s32.totalorder %s64, %s66
    %p73 = scmp.eq.s32.totalorder %s14, 1
    %p74 = por %p72, %p73
    %p75 = scmp.ne.s32.totalorder %s66, %s67
    %p76 = scmp.eq.s32.totalorder %s14, 0
    %p77 = por %p75, %p76
    %p78 = scmp.ne.s32.totalorder %s66, %s67
    %p79 = scmp.eq.s32.totalorder %s15, 1
    %p80 = por %p78, %p79
    %p82 = scmp.ne.s32.totalorder %s67, %s81
    %p83 = scmp.eq.s32.totalorder %s15, 0
    %p84 = por %p82, %p83
    %p85 = scmp.le.s32.totalorder 1, %s9
    %p86 = scmp.lt.s32.totalorder %s9, 3
    %p87 = pnand %p85, %p86
    %p88 = pneg %p87
    // Predicated region
    $region9: #{feedforward_prediction.2} parent=5 // pred_check
      _
    $region10: #{feedforward_prediction.2} parent=5 // pred_check_branch
      %90 = sbr.rel (%p87) target = $region12
    $region11: #{feedforward_prediction.2} parent=5 // pred_region
      %s91 = ssub.s32 %s9, 1
    $region12: #{feedforward_prediction.2} parent=5 // pred_fallthru
      _
    %p92 = scmp.lt.s32.totalorder %s9, 2
    // Predicated region
    $region13: #{feedforward_prediction.2} parent=5 // pred_check
      %p93 = pneg %p92
    $region14: #{feedforward_prediction.2} parent=5 // pred_check_branch
      %95 = sbr.rel (%p93) target = $region16
    $region15: #{feedforward_prediction.2} parent=5 // pred_region
      // Predicated region
      $region17: #{feedforward_prediction.2} parent=15 // pred_check
        %p96 = pneg %p29
      $region18: #{feedforward_prediction.2} parent=15 // pred_check_branch
        %98 = sbr.rel (%p96) target = $region20
      $region19: #{feedforward_prediction.2} parent=15 // pred_region
        %s99 = smul.u32 16, %s9
        %p100 = scmp.lt.s32.totalorder %s99, 31
        %s101 = scalar_select %p100, %s99, 31
        %s102 = smul.addr %s101, 8
        %s103 = scalar_lea.vmem %s0, %s102
        %s104 = smul.u32 16, %s9
      $region20: #{feedforward_prediction.2} parent=15 // pred_fallthru
        _
    $region16: #{feedforward_prediction.2} parent=5 // pred_fallthru
      _
    %p105 = scmp.le.s32.totalorder 1, %s9
    %p106 = scmp.lt.s32.totalorder %s9, 3
    %p107 = pnand %p105, %p106
    %p108 = pneg %p107
    // Predicated region
    $region21: #{feedforward_prediction.2} parent=5 // pred_check
      _
    $region22: #{feedforward_prediction.2} parent=5 // pred_check_branch
      %110 = sbr.rel (%p107) target = $region24
    $region23: #{feedforward_prediction.2} parent=5 // pred_region
      %s111 = ssub.s32 %s9, 1
      %s112 = smul.u32 16, %s14
      %p113 = scmp.lt.s32.totalorder %s112, 31
      %s114 = scalar_select %p113, %s112, 31
      %s115 = smul.addr %s114, 8
      %s116 = scalar_lea.vmem %s0, %s115
      %p117 = pneg %p35
      %p118 = pneg %p32
      %p119 = pneg %p56
      %p120 = pneg %p53
      %p121 = pneg %p77
      %p122 = pneg %p74
      %s123 = smul.u32 16, %s14
      %p124 = scmp.lt.s32.totalorder %s123, 31
      %s125 = scalar_select %p124, %s123, 31
      %s126 = smul.addr %s125, 8
      %s127 = scalar_lea.vmem %s0, %s126
      %s128 = smul.u32 16, %s14
      %p129 = scmp.eq.s32.totalorder %s14, 0
      // Predicated region
      $region25: #{feedforward_prediction.2} parent=23 // pred_check
        %p130 = pneg %p129
      $region26: #{feedforward_prediction.2} parent=23 // pred_check_branch
        %132 = sbr.rel (%p130) target = $region28
      $region27: #{feedforward_prediction.2} parent=23 // pred_region
        %vm133 = vcmask 253952
        %134 = vst.msk [vmem:[%s1] sm:$0x1] %vm133, 0.0
        %135 = vst.msk [vmem:[%s2] sm:$0x1] %vm133, 0.0
      $region28: #{feedforward_prediction.2} parent=23 // pred_fallthru
        _
      %v136 = vld [vmem:[%s127] sm:$0xff]
      %v137 = vld [vmem:[%s127 + $0x8] sm:$0xff]
      %v138 = vld [vmem:[%s127 + $0x10] sm:$0xff]
      %v139 = vld [vmem:[%s127 + $0x18] sm:$0xff]
      %v140 = vld [vmem:[%s127 + $0x20] sm:$0xff]
      %v141 = vld [vmem:[%s127 + $0x28] sm:$0xff]
      %v142 = vld [vmem:[%s127 + $0x30] sm:$0xff]
      %v143 = vld [vmem:[%s127 + $0x38] sm:$0xff]
      %v144 = vld [vmem:[%s127 + $0x40] sm:$0xff]
      %v145 = vld [vmem:[%s127 + $0x48] sm:$0xff]
      %v146 = vld [vmem:[%s127 + $0x50] sm:$0xff]
      %v147 = vld [vmem:[%s127 + $0x58] sm:$0xff]
      %v148 = vld [vmem:[%s127 + $0x60] sm:$0xff]
      %v149 = vld [vmem:[%s127 + $0x68] sm:$0xff]
      %v150 = vld [vmem:[%s127 + $0x70] sm:$0xff]
      %v151 = vld [vmem:[%s127 + $0x78] sm:$0xff]
      %v152 = vld [vmem:[%s1] sm:$0x1]
      %vm153 = vcmask 261120
      %v154 = vsel %vm153, %v136, 0.0
      %v155 = vsel %vm153, %v137, 0.0
      %v156 = vadd.f32 %v154, %v155
      %v157 = vsel %vm153, %v138, 0.0
      %v158 = vadd.f32 %v156, %v157
      %v159 = vsel %vm153, %v139, 0.0
      %v160 = vadd.f32 %v158, %v159
      %v161 = vsel %vm153, %v140, 0.0
      %v162 = vadd.f32 %v160, %v161
      %v163 = vsel %vm153, %v141, 0.0
      %v164 = vadd.f32 %v162, %v163
      %v165 = vsel %vm153, %v142, 0.0
      %v166 = vadd.f32 %v164, %v165
      %v167 = vsel %vm153, %v143, 0.0
      %v168 = vadd.f32 %v166, %v167
      %v169 = vsel %vm153, %v144, 0.0
      %v170 = vadd.f32 %v168, %v169
      %v171 = vsel %vm153, %v145, 0.0
      %v172 = vadd.f32 %v170, %v171
      %v173 = vsel %vm153, %v146, 0.0
      %v174 = vadd.f32 %v172, %v173
      %v175 = vsel %vm153, %v147, 0.0
      %v176 = vadd.f32 %v174, %v175
      %v177 = vsel %vm153, %v148, 0.0
      %v178 = vadd.f32 %v176, %v177
      %v179 = vsel %vm153, %v149, 0.0
      %v180 = vadd.f32 %v178, %v179
      %v181 = vsel %vm153, %v150, 0.0
      %v182 = vadd.f32 %v180, %v181
      %v183 = vsel %vm153, %v151, 0.0
      %v184 = vadd.f32 %v182, %v183
      %v185 = vrot.slane %v184, 4
      %v186 = vadd.f32 %v184, %v185
      %v187 = vrot.slane %v186, 2
      %v188 = vadd.f32 %v186, %v187
      %v189 = vrot.slane %v188, 1
      %v190 = vadd.f32 %v188, %v189
      %v191 = vadd.f32 %v152, %v190
      %vm192 = vcmask 253952
      %193 = vst.msk [vmem:[%s1] sm:$0x1] %vm192, %v191
      %v194 = vld [vmem:[%s2] sm:$0x1]
      %v195 = vmul.f32 %v136, %v136
      %v196 = vmul.f32 %v137, %v137
      %v197 = vmul.f32 %v138, %v138
      %v198 = vmul.f32 %v139, %v139
      %v199 = vmul.f32 %v140, %v140
      %v200 = vmul.f32 %v141, %v141
      %v201 = vmul.f32 %v142, %v142
      %v202 = vmul.f32 %v143, %v143
      %v203 = vmul.f32 %v144, %v144
      %v204 = vmul.f32 %v145, %v145
      %v205 = vmul.f32 %v146, %v146
      %v206 = vmul.f32 %v147, %v147
      %v207 = vmul.f32 %v148, %v148
      %v208 = vmul.f32 %v149, %v149
      %v209 = vmul.f32 %v150, %v150
      %v210 = vmul.f32 %v151, %v151
      %v211 = vsel %vm153, %v195, 0.0
      %v212 = vsel %vm153, %v196, 0.0
      %v213 = vadd.f32 %v211, %v212
      %v214 = vsel %vm153, %v197, 0.0
      %v215 = vadd.f32 %v213, %v214
      %v216 = vsel %vm153, %v198, 0.0
      %v217 = vadd.f32 %v215, %v216
      %v218 = vsel %vm153, %v199, 0.0
      %v219 = vadd.f32 %v217, %v218
      %v220 = vsel %vm153, %v200, 0.0
      %v221 = vadd.f32 %v219, %v220
      %v222 = vsel %vm153, %v201, 0.0
      %v223 = vadd.f32 %v221, %v222
      %v224 = vsel %vm153, %v202, 0.0
      %v225 = vadd.f32 %v223, %v224
      %v226 = vsel %vm153, %v203, 0.0
      %v227 = vadd.f32 %v225, %v226
      %v228 = vsel %vm153, %v204, 0.0
      %v229 = vadd.f32 %v227, %v228
      %v230 = vsel %vm153, %v205, 0.0
      %v231 = vadd.f32 %v229, %v230
      %v232 = vsel %vm153, %v206, 0.0
      %v233 = vadd.f32 %v231, %v232
      %v234 = vsel %vm153, %v207, 0.0
      %v235 = vadd.f32 %v233, %v234
      %v236 = vsel %vm153, %v208, 0.0
      %v237 = vadd.f32 %v235, %v236
      %v238 = vsel %vm153, %v209, 0.0
      %v239 = vadd.f32 %v237, %v238
      %v240 = vsel %vm153, %v210, 0.0
      %v241 = vadd.f32 %v239, %v240
      %v242 = vrot.slane %v241, 4
      %v243 = vadd.f32 %v241, %v242
      %v244 = vrot.slane %v243, 2
      %v245 = vadd.f32 %v243, %v244
      %v246 = vrot.slane %v245, 1
      %v247 = vadd.f32 %v245, %v246
      %v248 = vadd.f32 %v194, %v247
      %249 = vst.msk [vmem:[%s2] sm:$0x1] %vm192, %v248
      // Predicated region
      $region29: #{feedforward_prediction.2} parent=23 // pred_check
        %p250 = pneg %p53
      $region30: #{feedforward_prediction.2} parent=23 // pred_check_branch
        %252 = sbr.rel (%p250) target = $region32
      $region31: #{feedforward_prediction.2} parent=23 // pred_region
        _
      $region32: #{feedforward_prediction.2} parent=23 // pred_fallthru
        _
      // Predicated region
      $region33: #{feedforward_prediction.2} parent=23 // pred_check
        %p253 = pneg %p74
      $region34: #{feedforward_prediction.2} parent=23 // pred_check_branch
        %255 = sbr.rel (%p253) target = $region36
      $region35: #{feedforward_prediction.2} parent=23 // pred_region
        _
      $region36: #{feedforward_prediction.2} parent=23 // pred_fallthru
        _
      // Predicated region
      $region37: #{feedforward_prediction.2} parent=23 // pred_check
        %p256 = pneg %p53
      $region38: #{feedforward_prediction.2} parent=23 // pred_check_branch
        %258 = sbr.rel (%p256) target = $region40
      $region39: #{feedforward_prediction.2} parent=23 // pred_region
        _
      $region40: #{feedforward_prediction.2} parent=23 // pred_fallthru
        _
      // Predicated region
      $region41: #{feedforward_prediction.2} parent=23 // pred_check
        %p259 = pneg %p74
      $region42: #{feedforward_prediction.2} parent=23 // pred_check_branch
        %261 = sbr.rel (%p259) target = $region44
      $region43: #{feedforward_prediction.2} parent=23 // pred_region
        _
      $region44: #{feedforward_prediction.2} parent=23 // pred_fallthru
        _
    $region24: #{feedforward_prediction.2} parent=5 // pred_fallthru
      _
    %p262 = scmp.le.s32.totalorder 2, %s9
    // Predicated region
    $region45: #{feedforward_prediction.2} parent=5 // pred_check
      %p263 = pneg %p262
    $region46: #{feedforward_prediction.2} parent=5 // pred_check_branch
      %265 = sbr.rel (%p263) target = $region48
    $region47: #{feedforward_prediction.2} parent=5 // pred_region
      %s266 = ssub.s32 %s9, 2
    $region48: #{feedforward_prediction.2} parent=5 // pred_fallthru
      _
  $region6: #{feedforward_prediction.2} parent=0 // loop_footer
    %s13 = sadd.s32 1, %s9
  $region7: #{feedforward_prediction.2} parent=0 // loop_footer_branch
    %8 = sbr.rel target = $region3
  $region8: #{feedforward_prediction.2} parent=0 // loop_exit
    _

// kernel: feedforward_prediction.3
$region0: #{feedforward_prediction.3}
  #allocation0 [shape = 'u32[]', space=smem, size = 0x4, offset = 0x4, fixed_abs, tag = 'smem constant byte address 0x4 - core index']
  #allocation1 [shape = 'u32[72,128]{1,0:T(1,128)}', space=vmem, size = 0x9000, scoped, tag = 'internal scratch']
  %s0 = inlined_call_operand.vmem [shape: f32[256,32], index: 0, kind: input, shape index: {}]
  %s1 = inlined_call_operand.vmem [shape: f32[1,32], index: 1, kind: input, shape index: {}]
  %s2 = inlined_call_operand.vmem [shape: f32[1,32], index: 2, kind: input, shape index: {}]
  %s3 = inlined_call_operand.vmem [shape: bf16[32,128], index: 3, kind: input, shape index: {}]
  %s4 = inlined_call_operand.vmem [shape: f32[1,128], index: 4, kind: input, shape index: {}]
  %s5 = inlined_call_operand.vmem [shape: bf16[128,128], index: 5, kind: input, shape index: {}]
  %s6 = inlined_call_operand.vmem [shape: f32[1,128], index: 6, kind: input, shape index: {}]
  %s7 = inlined_call_operand.vmem [shape: bf16[128,128], index: 7, kind: input, shape index: {}]
  %s8 = inlined_call_operand.vmem [shape: f32[1,128], index: 8, kind: input, shape index: {}]
  %s9 = inlined_call_operand.vmem [shape: f32[256,128], index: 9, kind: output, shape index: {}]
  %s10 = sld [smem:[#allocation0]]
  $region69: #{feedforward_prediction.3} parent=0
    _
  %s12 = ssub.s32 1, %s10
  %s13 = scalar_select 0, %s12, %s10
  loop: start=0, step=1, limit=4
  $region2: #{feedforward_prediction.3} parent=0 // loop_pre_header
    _
  $region3: #{feedforward_prediction.3} parent=0 // loop_header
    %s15 = sphi 0, %s19
    %p16 = scmp.ge.s32.totalorder %s15, 4
    %s25 = sphi 0, %s27
    %s28 = sphi 0, %s25
    %s29 = sphi 0, %s28
    %s45 = sphi 0, %s29
    %s49 = sphi 0, %s49
    %s51 = sphi 0, %s49
    %s52 = sphi 0, %s51
    %s66 = sphi 0, %s52
    %s70 = sphi 0, %s70
    %s72 = sphi 0, %s70
    %s73 = sphi 0, %s72
    %s87 = sphi 0, %s73
    %s91 = sphi 0, %s91
    %s93 = sphi 0, %s91
    %s94 = sphi 0, %s93
    %s108 = sphi 0, %s94
    %s112 = sphi 0, %s112
    %s114 = sphi 0, %s112
    %s115 = sphi 0, %s114
    %s129 = sphi 0, %s115
    %s133 = sphi 0, %s133
    %s135 = sphi 0, %s133
    %s136 = sphi 0, %s135
    %s150 = sphi 0, %s136
    %s154 = sphi 0, %s154
    %s156 = sphi 0, %s154
    %s157 = sphi 0, %s156
    %s171 = sphi 0, %s157
    %s175 = sphi 0, %s175
    %s177 = sphi 0, %s175
    %s178 = sphi 0, %s177
    %s192 = sphi 0, %s178
    %s196 = sphi 0, %s196
    %s198 = sphi 0, %s196
    %s199 = sphi 0, %s198
    %s213 = sphi 0, %s199
    %s219 = sphi 0, %s221
    %s222 = sphi 0, %s219
    %s223 = sphi 0, %s222
    %s239 = sphi 0, %s223
  $region4: #{feedforward_prediction.3} parent=0 // loop_header_branch
    %18 = sbr.rel (%p16) target = $region8
  $region5: #{feedforward_prediction.3} parent=0 // loop_body
    %s20 = ssub.s32 %s15, 1
    %s21 = ssub.s32 %s15, 2
    %s22 = sadd.s32 %s15, 1
    %s23 = ssub.s32 %s15, %s22
    %p24 = scmp.eq.s32.totalorder %s23, 0
    %s26 = sadd.s32 %s25, 1
    %s27 = scalar_select %p24, %s25, %s26
    %p30 = pneg %p24
    %p31 = scmp.eq.s32.totalorder %s15, 1
    %p32 = por %p30, %p31
    %p33 = scmp.ne.s32.totalorder %s25, %s28
    %p34 = scmp.eq.s32.totalorder %s15, 0
    %p35 = por %p33, %p34
    %p36 = scmp.ne.s32.totalorder %s25, %s28
    %p37 = scmp.eq.s32.totalorder %s20, 1
    %p38 = por %p36, %p37
    %p39 = scmp.ne.s32.totalorder %s28, %s29
    %p40 = scmp.eq.s32.totalorder %s20, 0
    %p41 = por %p39, %p40
    %p42 = scmp.ne.s32.totalorder %s28, %s29
    %p43 = scmp.eq.s32.totalorder %s21, 1
    %p44 = por %p42, %p43
    %p46 = scmp.ne.s32.totalorder %s29, %s45
    %p47 = scmp.eq.s32.totalorder %s21, 0
    %p48 = por %p46, %p47
    %s50 = sadd.s32 %s49, 1
    %p53 = scmp.eq.s32.totalorder %s15, 1
    %p54 = scmp.ne.s32.totalorder %s49, %s51
    %p55 = scmp.eq.s32.totalorder %s15, 0
    %p56 = por %p54, %p55
    %p57 = scmp.ne.s32.totalorder %s49, %s51
    %p58 = scmp.eq.s32.totalorder %s20, 1
    %p59 = por %p57, %p58
    %p60 = scmp.ne.s32.totalorder %s51, %s52
    %p61 = scmp.eq.s32.totalorder %s20, 0
    %p62 = por %p60, %p61
    %p63 = scmp.ne.s32.totalorder %s51, %s52
    %p64 = scmp.eq.s32.totalorder %s21, 1
    %p65 = por %p63, %p64
    %p67 = scmp.ne.s32.totalorder %s52, %s66
    %p68 = scmp.eq.s32.totalorder %s21, 0
    %p69 = por %p67, %p68
    %s71 = sadd.s32 %s70, 1
    %p74 = scmp.eq.s32.totalorder %s15, 1
    %p75 = scmp.ne.s32.totalorder %s70, %s72
    %p76 = scmp.eq.s32.totalorder %s15, 0
    %p77 = por %p75, %p76
    %p78 = scmp.ne.s32.totalorder %s70, %s72
    %p79 = scmp.eq.s32.totalorder %s20, 1
    %p80 = por %p78, %p79
    %p81 = scmp.ne.s32.totalorder %s72, %s73
    %p82 = scmp.eq.s32.totalorder %s20, 0
    %p83 = por %p81, %p82
    %p84 = scmp.ne.s32.totalorder %s72, %s73
    %p85 = scmp.eq.s32.totalorder %s21, 1
    %p86 = por %p84, %p85
    %p88 = scmp.ne.s32.totalorder %s73, %s87
    %p89 = scmp.eq.s32.totalorder %s21, 0
    %p90 = por %p88, %p89
    %s92 = sadd.s32 %s91, 1
    %p95 = scmp.eq.s32.totalorder %s15, 1
    %p96 = scmp.ne.s32.totalorder %s91, %s93
    %p97 = scmp.eq.s32.totalorder %s15, 0
    %p98 = por %p96, %p97
    %p99 = scmp.ne.s32.totalorder %s91, %s93
    %p100 = scmp.eq.s32.totalorder %s20, 1
    %p101 = por %p99, %p100
    %p102 = scmp.ne.s32.totalorder %s93, %s94
    %p103 = scmp.eq.s32.totalorder %s20, 0
    %p104 = por %p102, %p103
    %p105 = scmp.ne.s32.totalorder %s93, %s94
    %p106 = scmp.eq.s32.totalorder %s21, 1
    %p107 = por %p105, %p106
    %p109 = scmp.ne.s32.totalorder %s94, %s108
    %p110 = scmp.eq.s32.totalorder %s21, 0
    %p111 = por %p109, %p110
    %s113 = sadd.s32 %s112, 1
    %p116 = scmp.eq.s32.totalorder %s15, 1
    %p117 = scmp.ne.s32.totalorder %s112, %s114
    %p118 = scmp.eq.s32.totalorder %s15, 0
    %p119 = por %p117, %p118
    %p120 = scmp.ne.s32.totalorder %s112, %s114
    %p121 = scmp.eq.s32.totalorder %s20, 1
    %p122 = por %p120, %p121
    %p123 = scmp.ne.s32.totalorder %s114, %s115
    %p124 = scmp.eq.s32.totalorder %s20, 0
    %p125 = por %p123, %p124
    %p126 = scmp.ne.s32.totalorder %s114, %s115
    %p127 = scmp.eq.s32.totalorder %s21, 1
    %p128 = por %p126, %p127
    %p130 = scmp.ne.s32.totalorder %s115, %s129
    %p131 = scmp.eq.s32.totalorder %s21, 0
    %p132 = por %p130, %p131
    %s134 = sadd.s32 %s133, 1
    %p137 = scmp.eq.s32.totalorder %s15, 1
    %p138 = scmp.ne.s32.totalorder %s133, %s135
    %p139 = scmp.eq.s32.totalorder %s15, 0
    %p140 = por %p138, %p139
    %p141 = scmp.ne.s32.totalorder %s133, %s135
    %p142 = scmp.eq.s32.totalorder %s20, 1
    %p143 = por %p141, %p142
    %p144 = scmp.ne.s32.totalorder %s135, %s136
    %p145 = scmp.eq.s32.totalorder %s20, 0
    %p146 = por %p144, %p145
    %p147 = scmp.ne.s32.totalorder %s135, %s136
    %p148 = scmp.eq.s32.totalorder %s21, 1
    %p149 = por %p147, %p148
    %p151 = scmp.ne.s32.totalorder %s136, %s150
    %p152 = scmp.eq.s32.totalorder %s21, 0
    %p153 = por %p151, %p152
    %s155 = sadd.s32 %s154, 1
    %p158 = scmp.eq.s32.totalorder %s15, 1
    %p159 = scmp.ne.s32.totalorder %s154, %s156
    %p160 = scmp.eq.s32.totalorder %s15, 0
    %p161 = por %p159, %p160
    %p162 = scmp.ne.s32.totalorder %s154, %s156
    %p163 = scmp.eq.s32.totalorder %s20, 1
    %p164 = por %p162, %p163
    %p165 = scmp.ne.s32.totalorder %s156, %s157
    %p166 = scmp.eq.s32.totalorder %s20, 0
    %p167 = por %p165, %p166
    %p168 = scmp.ne.s32.totalorder %s156, %s157
    %p169 = scmp.eq.s32.totalorder %s21, 1
    %p170 = por %p168, %p169
    %p172 = scmp.ne.s32.totalorder %s157, %s171
    %p173 = scmp.eq.s32.totalorder %s21, 0
    %p174 = por %p172, %p173
    %s176 = sadd.s32 %s175, 1
    %p179 = scmp.eq.s32.totalorder %s15, 1
    %p180 = scmp.ne.s32.totalorder %s175, %s177
    %p181 = scmp.eq.s32.totalorder %s15, 0
    %p182 = por %p180, %p181
    %p183 = scmp.ne.s32.totalorder %s175, %s177
    %p184 = scmp.eq.s32.totalorder %s20, 1
    %p185 = por %p183, %p184
    %p186 = scmp.ne.s32.totalorder %s177, %s178
    %p187 = scmp.eq.s32.totalorder %s20, 0
    %p188 = por %p186, %p187
    %p189 = scmp.ne.s32.totalorder %s177, %s178
    %p190 = scmp.eq.s32.totalorder %s21, 1
    %p191 = por %p189, %p190
    %p193 = scmp.ne.s32.totalorder %s178, %s192
    %p194 = scmp.eq.s32.totalorder %s21, 0
    %p195 = por %p193, %p194
    %s197 = sadd.s32 %s196, 1
    %p200 = scmp.eq.s32.totalorder %s15, 1
    %p201 = scmp.ne.s32.totalorder %s196, %s198
    %p202 = scmp.eq.s32.totalorder %s15, 0
    %p203 = por %p201, %p202
    %p204 = scmp.ne.s32.totalorder %s196, %s198
    %p205 = scmp.eq.s32.totalorder %s20, 1
    %p206 = por %p204, %p205
    %p207 = scmp.ne.s32.totalorder %s198, %s199
    %p208 = scmp.eq.s32.totalorder %s20, 0
    %p209 = por %p207, %p208
    %p210 = scmp.ne.s32.totalorder %s198, %s199
    %p211 = scmp.eq.s32.totalorder %s21, 1
    %p212 = por %p210, %p211
    %p214 = scmp.ne.s32.totalorder %s199, %s213
    %p215 = scmp.eq.s32.totalorder %s21, 0
    %p216 = por %p214, %p215
    %s217 = ssub.s32 %s15, %s22
    %p218 = scmp.eq.s32.totalorder %s217, 0
    %s220 = sadd.s32 %s219, 1
    %s221 = scalar_select %p218, %s219, %s220
    %p224 = pneg %p218
    %p225 = scmp.eq.s32.totalorder %s15, 1
    %p226 = por %p224, %p225
    %p227 = scmp.ne.s32.totalorder %s219, %s222
    %p228 = scmp.eq.s32.totalorder %s15, 0
    %p229 = por %p227, %p228
    %p230 = scmp.ne.s32.totalorder %s219, %s222
    %p231 = scmp.eq.s32.totalorder %s20, 1
    %p232 = por %p230, %p231
    %p233 = scmp.ne.s32.totalorder %s222, %s223
    %p234 = scmp.eq.s32.totalorder %s20, 0
    %p235 = por %p233, %p234
    %p236 = scmp.ne.s32.totalorder %s222, %s223
    %p237 = scmp.eq.s32.totalorder %s21, 1
    %p238 = por %p236, %p237
    %p240 = scmp.ne.s32.totalorder %s223, %s239
    %p241 = scmp.eq.s32.totalorder %s21, 0
    %p242 = por %p240, %p241
    %p243 = scmp.le.s32.totalorder 1, %s15
    %p244 = scmp.lt.s32.totalorder %s15, 3
    %p245 = pnand %p243, %p244
    %p246 = pneg %p245
    // Predicated region
    $region9: #{feedforward_prediction.3} parent=5 // pred_check
      _
    $region10: #{feedforward_prediction.3} parent=5 // pred_check_branch
      %248 = sbr.rel (%p245) target = $region12
    $region11: #{feedforward_prediction.3} parent=5 // pred_region
      %s249 = ssub.s32 %s15, 1
      // Predicated region
      $region13: #{feedforward_prediction.3} parent=11 // pred_check
        %p250 = pneg %p62
      $region14: #{feedforward_prediction.3} parent=11 // pred_check_branch
        %252 = sbr.rel (%p250) target = $region16
      $region15: #{feedforward_prediction.3} parent=11 // pred_region
        _
      $region16: #{feedforward_prediction.3} parent=11 // pred_fallthru
        _
      // Predicated region
      $region17: #{feedforward_prediction.3} parent=11 // pred_check
        %p253 = pneg %p83
      $region18: #{feedforward_prediction.3} parent=11 // pred_check_branch
        %255 = sbr.rel (%p253) target = $region20
      $region19: #{feedforward_prediction.3} parent=11 // pred_region
        _
      $region20: #{feedforward_prediction.3} parent=11 // pred_fallthru
        _
      // Predicated region
      $region21: #{feedforward_prediction.3} parent=11 // pred_check
        %p256 = pneg %p104
      $region22: #{feedforward_prediction.3} parent=11 // pred_check_branch
        %258 = sbr.rel (%p256) target = $region24
      $region23: #{feedforward_prediction.3} parent=11 // pred_region
        _
      $region24: #{feedforward_prediction.3} parent=11 // pred_fallthru
        _
      // Predicated region
      $region25: #{feedforward_prediction.3} parent=11 // pred_check
        %p259 = pneg %p125
      $region26: #{feedforward_prediction.3} parent=11 // pred_check_branch
        %261 = sbr.rel (%p259) target = $region28
      $region27: #{feedforward_prediction.3} parent=11 // pred_region
        _
      $region28: #{feedforward_prediction.3} parent=11 // pred_fallthru
        _
      // Predicated region
      $region29: #{feedforward_prediction.3} parent=11 // pred_check
        %p262 = pneg %p146
      $region30: #{feedforward_prediction.3} parent=11 // pred_check_branch
        %264 = sbr.rel (%p262) target = $region32
      $region31: #{feedforward_prediction.3} parent=11 // pred_region
        _
      $region32: #{feedforward_prediction.3} parent=11 // pred_fallthru
        _
      // Predicated region
      $region33: #{feedforward_prediction.3} parent=11 // pred_check
        %p265 = pneg %p167
      $region34: #{feedforward_prediction.3} parent=11 // pred_check_branch
        %267 = sbr.rel (%p265) target = $region36
      $region35: #{feedforward_prediction.3} parent=11 // pred_region
        _
      $region36: #{feedforward_prediction.3} parent=11 // pred_fallthru
        _
      // Predicated region
      $region37: #{feedforward_prediction.3} parent=11 // pred_check
        %p268 = pneg %p188
      $region38: #{feedforward_prediction.3} parent=11 // pred_check_branch
        %270 = sbr.rel (%p268) target = $region40
      $region39: #{feedforward_prediction.3} parent=11 // pred_region
        _
      $region40: #{feedforward_prediction.3} parent=11 // pred_fallthru
        _
      // Predicated region
      $region41: #{feedforward_prediction.3} parent=11 // pred_check
        %p271 = pneg %p209
      $region42: #{feedforward_prediction.3} parent=11 // pred_check_branch
        %273 = sbr.rel (%p271) target = $region44
      $region43: #{feedforward_prediction.3} parent=11 // pred_region
        _
      $region44: #{feedforward_prediction.3} parent=11 // pred_fallthru
        _
    $region12: #{feedforward_prediction.3} parent=5 // pred_fallthru
      _
    %p274 = scmp.lt.s32.totalorder %s15, 2
    // Predicated region
    $region45: #{feedforward_prediction.3} parent=5 // pred_check
      %p275 = pneg %p274
    $region46: #{feedforward_prediction.3} parent=5 // pred_check_branch
      %277 = sbr.rel (%p275) target = $region48
    $region47: #{feedforward_prediction.3} parent=5 // pred_region
      // Predicated region
      $region49: #{feedforward_prediction.3} parent=47 // pred_check
        %p278 = pneg %p35
      $region50: #{feedforward_prediction.3} parent=47 // pred_check_branch
        %280 = sbr.rel (%p278) target = $region52
      $region51: #{feedforward_prediction.3} parent=47 // pred_region
        %s281 = smul.u32 16, %s15
        %p282 = scmp.lt.s32.totalorder %s281, 31
        %s283 = scalar_select %p282, %s281, 31
        %s284 = smul.addr %s283, 8
        %s285 = scalar_lea.vmem %s0, %s284
        %s286 = smul.u32 16, %s15
      $region52: #{feedforward_prediction.3} parent=47 // pred_fallthru
        _
    $region48: #{feedforward_prediction.3} parent=5 // pred_fallthru
      _
    %p287 = scmp.le.s32.totalorder 1, %s15
    %p288 = scmp.lt.s32.totalorder %s15, 3
    %p289 = pnand %p287, %p288
    %p290 = pneg %p289
    // Predicated region
    $region53: #{feedforward_prediction.3} parent=5 // pred_check
      _
    $region54: #{feedforward_prediction.3} parent=5 // pred_check_branch
      %292 = sbr.rel (%p289) target = $region56
    $region55: #{feedforward_prediction.3} parent=5 // pred_region
      %s293 = ssub.s32 %s15, 1
      %s294 = smul.u32 16, %s20
      %p295 = scmp.lt.s32.totalorder %s294, 31
      %s296 = scalar_select %p295, %s294, 31
      %s297 = smul.addr %s296, 8
      %s298 = scalar_lea.vmem %s0, %s297
      %p299 = pneg %p41
      %p300 = pneg %p38
      %p301 = pneg %p62
      %p302 = pneg %p59
      %p303 = pneg %p83
      %p304 = pneg %p80
      %p305 = pneg %p104
      %p306 = pneg %p101
      %p307 = pneg %p125
      %p308 = pneg %p122
      %p309 = pneg %p146
      %p310 = pneg %p143
      %p311 = pneg %p167
      %p312 = pneg %p164
      %p313 = pneg %p188
      %p314 = pneg %p185
      %p315 = pneg %p209
      %p316 = pneg %p206
      %p317 = pneg %p235
      %p318 = pneg %p232
      %s319 = smul.u32 16, %s20
      %p320 = scmp.lt.s32.totalorder %s319, 31
      %s321 = scalar_select %p320, %s319, 31
      %s322 = smul.addr %s321, 8
      %s323 = scalar_lea.vmem %s9, %s322
      %s324 = smul.u32 16, %s20
      %p325 = scmp.lt.s32.totalorder %s324, 31
      %s326 = scalar_select %p325, %s324, 31
      %s327 = smul.addr %s326, 8
      %s328 = scalar_lea.vmem %s0, %s327
      %s329 = smul.u32 16, %s20
      %s330 = smul.u32 16, %s20
      %p331 = scmp.lt.s32.totalorder %s330, 31
      %s332 = scalar_select %p331, %s330, 31
      %s333 = smul.addr %s332, 8
      %s334 = scalar_lea.vmem %s9, %s333
      %s335 = smul.u32 16, %s20
      %v337 = vld [vmem:[%s328] sm:$0xff]
      %v338 = vld [vmem:[%s328 + $0x8] sm:$0xff]
      %v339 = vld [vmem:[%s328 + $0x10] sm:$0xff]
      %v340 = vld [vmem:[%s328 + $0x18] sm:$0xff]
      %v341 = vld [vmem:[%s328 + $0x20] sm:$0xff]
      %v342 = vld [vmem:[%s328 + $0x28] sm:$0xff]
      %v343 = vld [vmem:[%s328 + $0x30] sm:$0xff]
      %v344 = vld [vmem:[%s328 + $0x38] sm:$0xff]
      %v345 = vld [vmem:[%s328 + $0x40] sm:$0xff]
      %v346 = vld [vmem:[%s328 + $0x48] sm:$0xff]
      %v347 = vld [vmem:[%s328 + $0x50] sm:$0xff]
      %v348 = vld [vmem:[%s328 + $0x58] sm:$0xff]
      %v349 = vld [vmem:[%s328 + $0x60] sm:$0xff]
      %v350 = vld [vmem:[%s328 + $0x68] sm:$0xff]
      %v351 = vld [vmem:[%s328 + $0x70] sm:$0xff]
      %v352 = vld [vmem:[%s328 + $0x78] sm:$0xff]
      %v353 = vld [vmem:[%s1] sm:$0x1]
      %v355 = vperm.slane %v353, 0
      %v357 = vmul.f32 %v337, %v355
      %v358 = vmul.f32 %v338, %v355
      %v359 = vmul.f32 %v339, %v355
      %v360 = vmul.f32 %v340, %v355
      %v361 = vmul.f32 %v341, %v355
      %v362 = vmul.f32 %v342, %v355
      %v363 = vmul.f32 %v343, %v355
      %v364 = vmul.f32 %v344, %v355
      %v365 = vmul.f32 %v345, %v355
      %v366 = vmul.f32 %v346, %v355
      %v367 = vmul.f32 %v347, %v355
      %v368 = vmul.f32 %v348, %v355
      %v369 = vmul.f32 %v349, %v355
      %v370 = vmul.f32 %v350, %v355
      %v371 = vmul.f32 %v351, %v355
      %v372 = vmul.f32 %v352, %v355
      %v373 = vld [vmem:[%s2] sm:$0x1]
      %v375 = vperm.slane %v373, 0
      %v377 = vadd.f32 %v357, %v375
      %v378 = vadd.f32 %v358, %v375
      %v379 = vadd.f32 %v359, %v375
      %v380 = vadd.f32 %v360, %v375
      %v381 = vadd.f32 %v361, %v375
      %v382 = vadd.f32 %v362, %v375
      %v383 = vadd.f32 %v363, %v375
      %v384 = vadd.f32 %v364, %v375
      %v385 = vadd.f32 %v365, %v375
      %v386 = vadd.f32 %v366, %v375
      %v387 = vadd.f32 %v367, %v375
      %v388 = vadd.f32 %v368, %v375
      %v389 = vadd.f32 %v369, %v375
      %v390 = vadd.f32 %v370, %v375
      %v391 = vadd.f32 %v371, %v375
      %v392 = vadd.f32 %v372, %v375
      %v393 = vpack.c.bf16 %v378, %v377
      %v394 = vpack.c.bf16 %v380, %v379
      %v395 = vpack.c.bf16 %v382, %v381
      %v396 = vpack.c.bf16 %v384, %v383
      %v397 = vpack.c.bf16 %v386, %v385
      %v398 = vpack.c.bf16 %v388, %v387
      %v399 = vpack.c.bf16 %v390, %v389
      %v400 = vpack.c.bf16 %v392, %v391
      %v401 = vld [vmem:[%s3] sm:$0xf]
      %v402 = vld [vmem:[%s3 + $0x4] sm:$0xf]
      %v403 = vld [vmem:[%s3 + $0x8] sm:$0xf]
      %v404 = vld [vmem:[%s3 + $0xc] sm:$0xf]
      %v405 = vld [vmem:[%s4] sm:$0x1]
      %v407 = vperm.slane %v405, 0
      %v413 = vunpack.c.l.b16 %v401
      %v414 = vunpack.c.l.b16 %v402
      %v415 = vunpack.c.l.b16 %v403
      %v416 = vunpack.c.l.b16 %v404
      %v417 = vpack.c.b16 %v414, %v413
      %v418 = vpack.c.b16 %v416, %v415
      %vm421 = vcmask 261120
      %v423 = vsel %vm421, %v393, 0
      %v426 = vsel %vm421, %v394, 0
      %v429 = vsel %vm421, %v395, 0
      %v432 = vsel %vm421, %v396, 0
      %v435 = vsel %vm421, %v397, 0
      %v438 = vsel %vm421, %v398, 0
      %v441 = vsel %vm421, %v399, 0
      %v444 = vsel %vm421, %v400, 0
      %446 = vmatpush.bf16.msra.mxu0 0
      %447 = vmatpush.bf16.msra.mxu0 0
      %448 = vmatpush.bf16.msra.mxu0 0
      %449 = vmatpush.bf16.msra.mxu0 0
      %450 = vmatpush.bf16.msra.mxu0 0
      %451 = vmatpush.bf16.msra.mxu0 0
      %452 = vmatpush.bf16.msra.mxu0 %v418
      %453 = vmatpush.bf16.msra.mxu0 %v417
      %454 = vmatmul.bf16.gmra.mxu0 %v423
      %v455 = vpop.f32.mrf.mxu0
      %v456 = vadd.f32 %v407, %v455
      %v457 = vpop.f32.mrf.mxu0
      %v458 = vadd.f32 %v407, %v457
      %459 = vmatmul.bf16.gmra.mxu0 %v426
      %v460 = vpop.f32.mrf.mxu0
      %v461 = vadd.f32 %v407, %v460
      %v462 = vpop.f32.mrf.mxu0
      %v463 = vadd.f32 %v407, %v462
      %464 = vmatmul.bf16.gmra.mxu0 %v429
      %v465 = vpop.f32.mrf.mxu0
      %v466 = vadd.f32 %v407, %v465
      %v467 = vpop.f32.mrf.mxu0
      %v468 = vadd.f32 %v407, %v467
      %469 = vmatmul.bf16.gmra.mxu0 %v432
      %v470 = vpop.f32.mrf.mxu0
      %v471 = vadd.f32 %v407, %v470
      %v472 = vpop.f32.mrf.mxu0
      %v473 = vadd.f32 %v407, %v472
      %474 = vmatmul.bf16.gmra.mxu0 %v435
      %v475 = vpop.f32.mrf.mxu0
      %v476 = vadd.f32 %v407, %v475
      %v477 = vpop.f32.mrf.mxu0
      %v478 = vadd.f32 %v407, %v477
      %479 = vmatmul.bf16.gmra.mxu0 %v438
      %v480 = vpop.f32.mrf.mxu0
      %v481 = vadd.f32 %v407, %v480
      %v482 = vpop.f32.mrf.mxu0
      %v483 = vadd.f32 %v407, %v482
      %484 = vmatmul.bf16.gmra.mxu0 %v441
      %v485 = vpop.f32.mrf.mxu0
      %v486 = vadd.f32 %v407, %v485
      %v487 = vpop.f32.mrf.mxu0
      %v488 = vadd.f32 %v407, %v487
      %489 = vmatmul.bf16.gmra.mxu0 %v444
      %v490 = vpop.f32.mrf.mxu0
      %v491 = vadd.f32 %v407, %v490
      %v492 = vpop.f32.mrf.mxu0
      %v493 = vadd.f32 %v407, %v492
      %494 = vdwg.mxu0
      %v495 = vmax.f32 %v456, 0.0
      %v496 = vmax.f32 %v458, 0.0
      %v497 = vmax.f32 %v461, 0.0
      %v498 = vmax.f32 %v463, 0.0
      %v499 = vmax.f32 %v466, 0.0
      %v500 = vmax.f32 %v468, 0.0
      %v501 = vmax.f32 %v471, 0.0
      %v502 = vmax.f32 %v473, 0.0
      %v503 = vmax.f32 %v476, 0.0
      %v504 = vmax.f32 %v478, 0.0
      %v505 = vmax.f32 %v481, 0.0
      %v506 = vmax.f32 %v483, 0.0
      %v507 = vmax.f32 %v486, 0.0
      %v508 = vmax.f32 %v488, 0.0
      %v509 = vmax.f32 %v491, 0.0
      %v510 = vmax.f32 %v493, 0.0
      %v511 = vpack.c.bf16 %v496, %v495
      %v512 = vpack.c.bf16 %v498, %v497
      %v513 = vpack.c.bf16 %v500, %v499
      %v514 = vpack.c.bf16 %v502, %v501
      %v515 = vpack.c.bf16 %v504, %v503
      %v516 = vpack.c.bf16 %v506, %v505
      %v517 = vpack.c.bf16 %v508, %v507
      %v518 = vpack.c.bf16 %v510, %v509
      %v519 = vld [vmem:[%s5] sm:$0xf]
      %v520 = vld [vmem:[%s5 + $0x4] sm:$0xf]
      %v521 = vld [vmem:[%s5 + $0x8] sm:$0xf]
      %v522 = vld [vmem:[%s5 + $0xc] sm:$0xf]
      %v523 = vld [vmem:[%s5 + $0x10] sm:$0xf]
      %v524 = vld [vmem:[%s5 + $0x14] sm:$0xf]
      %v525 = vld [vmem:[%s5 + $0x18] sm:$0xf]
      %v526 = vld [vmem:[%s5 + $0x1c] sm:$0xf]
      %v527 = vld [vmem:[%s5 + $0x20] sm:$0xf]
      %v528 = vld [vmem:[%s5 + $0x24] sm:$0xf]
      %v529 = vld [vmem:[%s5 + $0x28] sm:$0xf]
      %v530 = vld [vmem:[%s5 + $0x2c] sm:$0xf]
      %v531 = vld [vmem:[%s5 + $0x30] sm:$0xf]
      %v532 = vld [vmem:[%s5 + $0x34] sm:$0xf]
      %v533 = vld [vmem:[%s5 + $0x38] sm:$0xf]
      %v534 = vld [vmem:[%s5 + $0x3c] sm:$0xf]
      %v535 = vld [vmem:[%s6] sm:$0x1]
      %v537 = vperm.slane %v535, 0
      %v555 = vunpack.c.l.b16 %v519
      %v556 = vunpack.c.l.b16 %v520
      %v557 = vunpack.c.l.b16 %v521
      %v558 = vunpack.c.l.b16 %v522
      %v559 = vunpack.c.l.b16 %v523
      %v560 = vunpack.c.l.b16 %v524
      %v561 = vunpack.c.l.b16 %v525
      %v562 = vunpack.c.l.b16 %v526
      %v563 = vunpack.c.l.b16 %v527
      %v564 = vunpack.c.l.b16 %v528
      %v565 = vunpack.c.l.b16 %v529
      %v566 = vunpack.c.l.b16 %v530
      %v567 = vunpack.c.l.b16 %v531
      %v568 = vunpack.c.l.b16 %v532
      %v569 = vunpack.c.l.b16 %v533
      %v570 = vunpack.c.l.b16 %v534
      %v571 = vpack.c.b16 %v556, %v555
      %v572 = vpack.c.b16 %v558, %v557
      %v573 = vpack.c.b16 %v560, %v559
      %v574 = vpack.c.b16 %v562, %v561
      %v575 = vpack.c.b16 %v564, %v563
      %v576 = vpack.c.b16 %v566, %v565
      %v577 = vpack.c.b16 %v568, %v567
      %v578 = vpack.c.b16 %v570, %v569
      %587 = vmatpush.bf16.msra.mxu0 %v578
      %588 = vmatpush.bf16.msra.mxu0 %v577
      %589 = vmatpush.bf16.msra.mxu0 %v576
      %590 = vmatpush.bf16.msra.mxu0 %v575
      %591 = vmatpush.bf16.msra.mxu0 %v574
      %592 = vmatpush.bf16.msra.mxu0 %v573
      %593 = vmatpush.bf16.msra.mxu0 %v572
      %594 = vmatpush.bf16.msra.mxu0 %v571
      %595 = vmatmul.bf16.gmra.mxu0 %v511
      %v596 = vpop.f32.mrf.mxu0
      %v597 = vadd.f32 %v537, %v596
      %v598 = vpop.f32.mrf.mxu0
      %v599 = vadd.f32 %v537, %v598
      %600 = vmatmul.bf16.gmra.mxu0 %v512
      %v601 = vpop.f32.mrf.mxu0
      %v602 = vadd.f32 %v537, %v601
      %v603 = vpop.f32.mrf.mxu0
      %v604 = vadd.f32 %v537, %v603
      %605 = vmatmul.bf16.gmra.mxu0 %v513
      %v606 = vpop.f32.mrf.mxu0
      %v607 = vadd.f32 %v537, %v606
      %v608 = vpop.f32.mrf.mxu0
      %v609 = vadd.f32 %v537, %v608
      %610 = vmatmul.bf16.gmra.mxu0 %v514
      %v611 = vpop.f32.mrf.mxu0
      %v612 = vadd.f32 %v537, %v611
      %v613 = vpop.f32.mrf.mxu0
      %v614 = vadd.f32 %v537, %v613
      %615 = vmatmul.bf16.gmra.mxu0 %v515
      %v616 = vpop.f32.mrf.mxu0
      %v617 = vadd.f32 %v537, %v616
      %v618 = vpop.f32.mrf.mxu0
      %v619 = vadd.f32 %v537, %v618
      %620 = vmatmul.bf16.gmra.mxu0 %v516
      %v621 = vpop.f32.mrf.mxu0
      %v622 = vadd.f32 %v537, %v621
      %v623 = vpop.f32.mrf.mxu0
      %v624 = vadd.f32 %v537, %v623
      %625 = vmatmul.bf16.gmra.mxu0 %v517
      %v626 = vpop.f32.mrf.mxu0
      %v627 = vadd.f32 %v537, %v626
      %v628 = vpop.f32.mrf.mxu0
      %v629 = vadd.f32 %v537, %v628
      %630 = vmatmul.bf16.gmra.mxu0 %v518
      %v631 = vpop.f32.mrf.mxu0
      %v632 = vadd.f32 %v537, %v631
      %v633 = vpop.f32.mrf.mxu0
      %v634 = vadd.f32 %v537, %v633
      %635 = vdwg.mxu0
      %v636 = vmax.f32 %v597, 0.0
      %v637 = vmax.f32 %v599, 0.0
      %v638 = vmax.f32 %v602, 0.0
      %v639 = vmax.f32 %v604, 0.0
      %v640 = vmax.f32 %v607, 0.0
      %v641 = vmax.f32 %v609, 0.0
      %v642 = vmax.f32 %v612, 0.0
      %v643 = vmax.f32 %v614, 0.0
      %v644 = vmax.f32 %v617, 0.0
      %v645 = vmax.f32 %v619, 0.0
      %v646 = vmax.f32 %v622, 0.0
      %v647 = vmax.f32 %v624, 0.0
      %v648 = vmax.f32 %v627, 0.0
      %v649 = vmax.f32 %v629, 0.0
      %v650 = vmax.f32 %v632, 0.0
      %v651 = vmax.f32 %v634, 0.0
      %v652 = vpack.c.bf16 %v637, %v636
      %v653 = vpack.c.bf16 %v639, %v638
      %v654 = vpack.c.bf16 %v641, %v640
      %v655 = vpack.c.bf16 %v643, %v642
      %v656 = vpack.c.bf16 %v645, %v644
      %v657 = vpack.c.bf16 %v647, %v646
      %v658 = vpack.c.bf16 %v649, %v648
      %v659 = vpack.c.bf16 %v651, %v650
      %v660 = vld [vmem:[%s7] sm:$0xf]
      %v661 = vld [vmem:[%s7 + $0x4] sm:$0xf]
      %v662 = vld [vmem:[%s7 + $0x8] sm:$0xf]
      %v663 = vld [vmem:[%s7 + $0xc] sm:$0xf]
      %v664 = vld [vmem:[%s7 + $0x10] sm:$0xf]
      %v665 = vld [vmem:[%s7 + $0x14] sm:$0xf]
      %v666 = vld [vmem:[%s7 + $0x18] sm:$0xf]
      %v667 = vld [vmem:[%s7 + $0x1c] sm:$0xf]
      %v668 = vld [vmem:[%s7 + $0x20] sm:$0xf]
      %v669 = vld [vmem:[%s7 + $0x24] sm:$0xf]
      %v670 = vld [vmem:[%s7 + $0x28] sm:$0xf]
      %v671 = vld [vmem:[%s7 + $0x2c] sm:$0xf]
      %v672 = vld [vmem:[%s7 + $0x30] sm:$0xf]
      %v673 = vld [vmem:[%s7 + $0x34] sm:$0xf]
      %v674 = vld [vmem:[%s7 + $0x38] sm:$0xf]
      %v675 = vld [vmem:[%s7 + $0x3c] sm:$0xf]
      %v676 = vld [vmem:[%s8] sm:$0x1]
      %v678 = vperm.slane %v676, 0
      %v696 = vunpack.c.l.b16 %v660
      %v697 = vunpack.c.l.b16 %v661
      %v698 = vunpack.c.l.b16 %v662
      %v699 = vunpack.c.l.b16 %v663
      %v700 = vunpack.c.l.b16 %v664
      %v701 = vunpack.c.l.b16 %v665
      %v702 = vunpack.c.l.b16 %v666
      %v703 = vunpack.c.l.b16 %v667
      %v704 = vunpack.c.l.b16 %v668
      %v705 = vunpack.c.l.b16 %v669
      %v706 = vunpack.c.l.b16 %v670
      %v707 = vunpack.c.l.b16 %v671
      %v708 = vunpack.c.l.b16 %v672
      %v709 = vunpack.c.l.b16 %v673
      %v710 = vunpack.c.l.b16 %v674
      %v711 = vunpack.c.l.b16 %v675
      %v712 = vpack.c.b16 %v697, %v696
      %v713 = vpack.c.b16 %v699, %v698
      %v714 = vpack.c.b16 %v701, %v700
      %v715 = vpack.c.b16 %v703, %v702
      %v716 = vpack.c.b16 %v705, %v704
      %v717 = vpack.c.b16 %v707, %v706
      %v718 = vpack.c.b16 %v709, %v708
      %v719 = vpack.c.b16 %v711, %v710
      %728 = vmatpush.bf16.msra.mxu0 %v719
      %729 = vmatpush.bf16.msra.mxu0 %v718
      %730 = vmatpush.bf16.msra.mxu0 %v717
      %731 = vmatpush.bf16.msra.mxu0 %v716
      %732 = vmatpush.bf16.msra.mxu0 %v715
      %733 = vmatpush.bf16.msra.mxu0 %v714
      %734 = vmatpush.bf16.msra.mxu0 %v713
      %735 = vmatpush.bf16.msra.mxu0 %v712
      %736 = vmatmul.bf16.gmra.mxu0 %v652
      %v737 = vpop.f32.mrf.mxu0
      %v738 = vadd.f32 %v678, %v737
      %v739 = vpop.f32.mrf.mxu0
      %v740 = vadd.f32 %v678, %v739
      %741 = vmatmul.bf16.gmra.mxu0 %v653
      %v742 = vpop.f32.mrf.mxu0
      %v743 = vadd.f32 %v678, %v742
      %v744 = vpop.f32.mrf.mxu0
      %v745 = vadd.f32 %v678, %v744
      %746 = vmatmul.bf16.gmra.mxu0 %v654
      %v747 = vpop.f32.mrf.mxu0
      %v748 = vadd.f32 %v678, %v747
      %v749 = vpop.f32.mrf.mxu0
      %v750 = vadd.f32 %v678, %v749
      %751 = vmatmul.bf16.gmra.mxu0 %v655
      %v752 = vpop.f32.mrf.mxu0
      %v753 = vadd.f32 %v678, %v752
      %v754 = vpop.f32.mrf.mxu0
      %v755 = vadd.f32 %v678, %v754
      %756 = vmatmul.bf16.gmra.mxu0 %v656
      %v757 = vpop.f32.mrf.mxu0
      %v758 = vadd.f32 %v678, %v757
      %v759 = vpop.f32.mrf.mxu0
      %v760 = vadd.f32 %v678, %v759
      %761 = vmatmul.bf16.gmra.mxu0 %v657
      %v762 = vpop.f32.mrf.mxu0
      %v763 = vadd.f32 %v678, %v762
      %v764 = vpop.f32.mrf.mxu0
      %v765 = vadd.f32 %v678, %v764
      %766 = vmatmul.bf16.gmra.mxu0 %v658
      %v767 = vpop.f32.mrf.mxu0
      %v768 = vadd.f32 %v678, %v767
      %v769 = vpop.f32.mrf.mxu0
      %v770 = vadd.f32 %v678, %v769
      %771 = vmatmul.bf16.gmra.mxu0 %v659
      %v772 = vpop.f32.mrf.mxu0
      %v773 = vadd.f32 %v678, %v772
      %v774 = vpop.f32.mrf.mxu0
      %v775 = vadd.f32 %v678, %v774
      %776 = vdwg.mxu0
      %777 = vst [vmem:[%s334] sm:$0xff] %v738
      %778 = vst [vmem:[%s334 + $0x8] sm:$0xff] %v740
      %779 = vst [vmem:[%s334 + $0x10] sm:$0xff] %v743
      %780 = vst [vmem:[%s334 + $0x18] sm:$0xff] %v745
      %781 = vst [vmem:[%s334 + $0x20] sm:$0xff] %v748
      %782 = vst [vmem:[%s334 + $0x28] sm:$0xff] %v750
      %783 = vst [vmem:[%s334 + $0x30] sm:$0xff] %v753
      %784 = vst [vmem:[%s334 + $0x38] sm:$0xff] %v755
      %785 = vst [vmem:[%s334 + $0x40] sm:$0xff] %v758
      %786 = vst [vmem:[%s334 + $0x48] sm:$0xff] %v760
      %787 = vst [vmem:[%s334 + $0x50] sm:$0xff] %v763
      %788 = vst [vmem:[%s334 + $0x58] sm:$0xff] %v765
      %789 = vst [vmem:[%s334 + $0x60] sm:$0xff] %v768
      %790 = vst [vmem:[%s334 + $0x68] sm:$0xff] %v770
      %791 = vst [vmem:[%s334 + $0x70] sm:$0xff] %v773
      %792 = vst [vmem:[%s334 + $0x78] sm:$0xff] %v775
      %s793 = smul.u32 16, %s20
      %p794 = scmp.lt.s32.totalorder %s793, 31
      %s795 = scalar_select %p794, %s793, 31
      %s796 = smul.addr %s795, 8
      %s797 = scalar_lea.vmem %s9, %s796
      // Predicated region
      $region57: #{feedforward_prediction.3} parent=55 // pred_check
        %p798 = pneg %p232
      $region58: #{feedforward_prediction.3} parent=55 // pred_check_branch
        %800 = sbr.rel (%p798) target = $region60
      $region59: #{feedforward_prediction.3} parent=55 // pred_region
        %s801 = smul.u32 16, %s20
      $region60: #{feedforward_prediction.3} parent=55 // pred_fallthru
        _
    $region56: #{feedforward_prediction.3} parent=5 // pred_fallthru
      _
    %p802 = scmp.le.s32.totalorder 2, %s15
    // Predicated region
    $region61: #{feedforward_prediction.3} parent=5 // pred_check
      %p803 = pneg %p802
    $region62: #{feedforward_prediction.3} parent=5 // pred_check_branch
      %805 = sbr.rel (%p803) target = $region64
    $region63: #{feedforward_prediction.3} parent=5 // pred_region
      %s806 = ssub.s32 %s15, 2
      // Predicated region
      $region65: #{feedforward_prediction.3} parent=63 // pred_check
        %p807 = pneg %p238
      $region66: #{feedforward_prediction.3} parent=63 // pred_check_branch
        %809 = sbr.rel (%p807) target = $region68
      $region67: #{feedforward_prediction.3} parent=63 // pred_region
        %s810 = smul.u32 16, %s21
        %p811 = scmp.lt.s32.totalorder %s810, 31
        %s812 = scalar_select %p811, %s810, 31
        %s813 = smul.addr %s812, 8
        %s814 = scalar_lea.vmem %s9, %s813
      $region68: #{feedforward_prediction.3} parent=63 // pred_fallthru
        _
    $region64: #{feedforward_prediction.3} parent=5 // pred_fallthru
      _
  $region6: #{feedforward_prediction.3} parent=0 // loop_footer
    %s19 = sadd.s32 1, %s15
  $region7: #{feedforward_prediction.3} parent=0 // loop_footer_branch
    %14 = sbr.rel target = $region3
  $region8: #{feedforward_prediction.3} parent=0 // loop_exit
    _

</llo_original>
